<compile_context>
chip_gen: v7x
topology: tpu7x:2x2x1
jax: 0.10.0
libtpu: 0.0.40
codegen_flags: <defaults>
</compile_context>

<pallas_src>
import functools

import jax
import jax.numpy as jnp
from jax.experimental import pallas as pl
from jax.experimental.pallas import tpu as pltpu

EPS = 1e-5      # torch.nn.LayerNorm default
LANE = 128


def _round_up(x, m):
    return ((x + m - 1) // m) * m


def _pick_tile(B, block_b):
    """Largest batch tile under the VMEM cap (block_b) that keeps the grid at
    >=2 steps so both v7x TensorCores get work; multiples of 8 sublanes."""
    if B <= 16:
        return B                                   # single block == full dim
    return min(block_b, _round_up(pl.cdiv(B, 2), 8))


def _layernorm_padded(x, gamma, beta, true_dim):
    """LayerNorm over the last axis where only the first `true_dim` lanes are
    real features.  Padded lanes of x are exactly zero (padded weight columns,
    biases, gamma, beta are all zero), so plain sums over the padded width
    equal sums over the true features -- no lane mask needed."""
    inv_n = jnp.float32(1.0 / true_dim)
    mean = jnp.sum(x, axis=-1, keepdims=True) * inv_n
    ex2 = jnp.sum(x * x, axis=-1, keepdims=True) * inv_n
    var = jnp.maximum(ex2 - mean * mean, 0.0)      # (TB,1): clamp is ~free
    # gamma/beta are zero on padded lanes -> output pads stay zero.
    return (x - mean) * jax.lax.rsqrt(var + EPS) * gamma + beta


def actor_kernel(state_ref, w1_ref, b1_ref, g1_ref, be1_ref,
                 w2_ref, b2_ref, g2_ref, be2_ref, w3_ref, b3_ref,
                 mu_ref, *, hidden1, hidden2):
    # --- linear1 on the MXU (K padded 4->8, f32 accumulate; MXU is idle) ---
    h1 = jnp.dot(state_ref[...], w1_ref[...],
                 preferred_element_type=jnp.float32) + b1_ref[...]
    h1 = _layernorm_padded(h1, g1_ref[...], be1_ref[...], hidden1)
    h1 = jnp.maximum(h1, 0.0)

    # --- linear2 (K=512) ---
    h2 = jnp.dot(h1, w2_ref[...],
                 preferred_element_type=jnp.float32) + b2_ref[...]
    h2 = _layernorm_padded(h2, g2_ref[...], be2_ref[...], hidden2)
    h2 = jnp.maximum(h2, 0.0)

    # --- output head + tanh (padded lanes stay 0 since tanh(0)=0) ---
    mu = jnp.dot(h2, w3_ref[...],
                 preferred_element_type=jnp.float32) + b3_ref[...]
    mu_ref[...] = jnp.tanh(mu).astype(mu_ref.dtype)


def actor_forward(state, params, dims, *, block_b=1024):
    B, ni = state.shape
    KP = params["w1"].shape[0]
    H1P = params["w1"].shape[1]
    H2P = params["w2"].shape[1]
    AP = params["w3"].shape[1]

    # Pad the tiny feature axis to the stored sublane-aligned width (8).
    state_p = jnp.pad(state, ((0, 0), (0, KP - ni)))

    tb = _pick_tile(B, block_b)
    grid = (pl.cdiv(B, tb),)

    def row_spec(shape):       # tiled over the batch axis
        return pl.BlockSpec(shape, lambda i: (i, 0))

    def res_spec(shape):       # resident: same block every grid step
        return pl.BlockSpec(shape, lambda i: (0, 0))

    kern = functools.partial(actor_kernel,
                             hidden1=dims["hidden1"], hidden2=dims["hidden2"])

    mu_padded = pl.pallas_call(
        kern,
        out_shape=jax.ShapeDtypeStruct((B, AP), jnp.float32),
        grid_spec=pltpu.PrefetchScalarGridSpec(
            num_scalar_prefetch=0,
            grid=grid,
            in_specs=[
                row_spec((tb, KP)),
                res_spec((KP, H1P)),
                res_spec((1, H1P)), res_spec((1, H1P)), res_spec((1, H1P)),
                res_spec((H1P, H2P)),
                res_spec((1, H2P)), res_spec((1, H2P)), res_spec((1, H2P)),
                res_spec((H2P, AP)),
                res_spec((1, AP)),
            ],
            out_specs=row_spec((tb, AP)),
        ),
        compiler_params=pltpu.CompilerParams(
            dimension_semantics=("parallel",),
            vmem_limit_bytes=48 * 1024 * 1024),
    )(state_p,
      params["w1"], params["b1"], params["g1"], params["be1"],
      params["w2"], params["b2"], params["g2"], params["be2"],
      params["w3"], params["b3"])

    return mu_padded[:, :dims["num_actions"]]


def init_params(key, num_inputs=4, hidden1=400, hidden2=300, num_actions=2,
                final_bias=0.003):
    """Deterministic init mirroring the module's __init__ ranges.
    Weights stored transposed (in, out), zero-padded to aligned shapes."""
    KP = _round_up(num_inputs, 8)
    H1P = _round_up(hidden1, LANE)
    H2P = _round_up(hidden2, LANE)
    AP = _round_up(num_actions, LANE)

    ks = jax.random.split(key, 6)

    def unif(k, shape, r):
        return jax.random.uniform(k, shape, jnp.float32, minval=-r, maxval=r)

    def pad2(a, rows, cols):
        return jnp.pad(a, ((0, rows - a.shape[0]), (0, cols - a.shape[1])))

    w1 = pad2(unif(ks[0], (num_inputs, hidden1), num_inputs ** -0.5), KP, H1P)
    b1 = pad2(unif(ks[1], (1, hidden1), hidden1 ** -0.5), 1, H1P)

    w2 = pad2(unif(ks[2], (hidden1, hidden2), hidden1 ** -0.5), H1P, H2P)
    b2 = pad2(unif(ks[3], (1, hidden2), hidden2 ** -0.5), 1, H2P)

    w3 = pad2(unif(ks[4], (hidden2, num_actions), final_bias), H2P, AP)
    b3 = pad2(unif(ks[5], (1, num_actions), hidden2 ** -0.5), 1, AP)

    g1 = pad2(jnp.ones((1, hidden1), jnp.float32), 1, H1P)
    be1 = jnp.zeros((1, H1P), jnp.float32)
    g2 = pad2(jnp.ones((1, hidden2), jnp.float32), 1, H2P)
    be2 = jnp.zeros((1, H2P), jnp.float32)

    params = dict(w1=w1, b1=b1, g1=g1, be1=be1,
                  w2=w2, b2=b2, g2=g2, be2=be2,
                  w3=w3, b3=b3)
    dims = dict(num_inputs=num_inputs, hidden1=hidden1, hidden2=hidden2,
                num_actions=num_actions)
    return params, dims


def actor_forward_ref(state, p, dims):
    """Pure-JAX f32 reference, numerically identical to the PyTorch module."""
    ni, h1, h2, na = (dims["num_inputs"], dims["hidden1"],
                      dims["hidden2"], dims["num_actions"])

    def layernorm(x, gamma, beta):
        mean = jnp.mean(x, axis=-1, keepdims=True)
        var = jnp.mean((x - mean) ** 2, axis=-1, keepdims=True)
        return (x - mean) * jax.lax.rsqrt(var + EPS) * gamma + beta

    x = state @ p["w1"][:ni, :h1] + p["b1"][:, :h1]
    x = layernorm(x, p["g1"][:, :h1], p["be1"][:, :h1])
    x = jnp.maximum(x, 0.0)
    x = x @ p["w2"][:h1, :h2] + p["b2"][:, :h2]
    x = layernorm(x, p["g2"][:, :h2], p["be2"][:, :h2])
    x = jnp.maximum(x, 0.0)
    x = x @ p["w3"][:h2, :na] + p["b3"][:, :na]
    return jnp.tanh(x)


if __name__ == "__main__":
    key = jax.random.PRNGKey(0)
    k_param, k_state = jax.random.split(key)

    params, dims = init_params(k_param)

    # Small shape consistent with the module: batch=2, num_inputs=4.
    state = jax.random.normal(k_state, (2, dims["num_inputs"]), jnp.float32)
    mu = jax.block_until_ready(actor_forward(state, params, dims))
    mu_ref = actor_forward_ref(state, params, dims)
    assert mu.shape == (2, dims["num_actions"])
    assert jnp.allclose(mu, mu_ref, atol=1e-3, rtol=1e-3), (mu, mu_ref)

    # Medium batch: 2 grid steps of 256 rows (exercises the pipelined path).
    state_med = jax.random.normal(jax.random.PRNGKey(1),
                                  (512, dims["num_inputs"]), jnp.float32)
    mu_med = jax.block_until_ready(actor_forward(state_med, params, dims))
    assert jnp.allclose(mu_med, actor_forward_ref(state_med, params, dims),
                        atol=1e-3, rtol=1e-3)

    # Large batch: 2 grid steps at the full TB=1024 tile (VMEM-budget path).
    state_big = jax.random.normal(jax.random.PRNGKey(2),
                                  (2048, dims["num_inputs"]), jnp.float32)
    mu_big = jax.block_until_ready(actor_forward(state_big, params, dims))
    assert jnp.allclose(mu_big, actor_forward_ref(state_big, params, dims),
                        atol=1e-3, rtol=1e-3)

    print("KERNEL_OK")
</pallas_src>

<mosaic_0001>
module attributes {stable_mosaic.version = 11 : i64} {
  func.func @actor_kernel(%arg0: i32, %arg1: memref<2x8xf32, #tpu.memory_space<vmem>>, %arg2: memref<8x512xf32, #tpu.memory_space<vmem>>, %arg3: memref<1x512xf32, #tpu.memory_space<vmem>>, %arg4: memref<1x512xf32, #tpu.memory_space<vmem>>, %arg5: memref<1x512xf32, #tpu.memory_space<vmem>>, %arg6: memref<512x384xf32, #tpu.memory_space<vmem>>, %arg7: memref<1x384xf32, #tpu.memory_space<vmem>>, %arg8: memref<1x384xf32, #tpu.memory_space<vmem>>, %arg9: memref<1x384xf32, #tpu.memory_space<vmem>>, %arg10: memref<384x128xf32, #tpu.memory_space<vmem>>, %arg11: memref<1x128xf32, #tpu.memory_space<vmem>>, %arg12: memref<2x128xf32, #tpu.memory_space<vmem>>) attributes {dimension_semantics = [#tpu.dimension_semantics<parallel>], iteration_bounds = array<i64: 1>, scalar_prefetch = 0 : i64, scratch_operands = 0 : i64, tpu.core_type = #tpu.core_type<tc>, window_params = [{transform_indices = @transform_0, window_bounds = array<i64: 2, 8>}, {pipeline_mode = #tpu.pipeline_mode<synchronous>, transform_indices = @transform_1, window_bounds = array<i64: 8, 512>}, {pipeline_mode = #tpu.pipeline_mode<synchronous>, transform_indices = @transform_2, window_bounds = array<i64: 1, 512>}, {pipeline_mode = #tpu.pipeline_mode<synchronous>, transform_indices = @transform_3, window_bounds = array<i64: 1, 512>}, {pipeline_mode = #tpu.pipeline_mode<synchronous>, transform_indices = @transform_4, window_bounds = array<i64: 1, 512>}, {pipeline_mode = #tpu.pipeline_mode<synchronous>, transform_indices = @transform_5, window_bounds = array<i64: 512, 384>}, {pipeline_mode = #tpu.pipeline_mode<synchronous>, transform_indices = @transform_6, window_bounds = array<i64: 1, 384>}, {pipeline_mode = #tpu.pipeline_mode<synchronous>, transform_indices = @transform_7, window_bounds = array<i64: 1, 384>}, {pipeline_mode = #tpu.pipeline_mode<synchronous>, transform_indices = @transform_8, window_bounds = array<i64: 1, 384>}, {pipeline_mode = #tpu.pipeline_mode<synchronous>, transform_indices = @transform_9, window_bounds = array<i64: 384, 128>}, {pipeline_mode = #tpu.pipeline_mode<synchronous>, transform_indices = @transform_10, window_bounds = array<i64: 1, 128>}, {transform_indices = @transform_11, window_bounds = array<i64: 2, 128>}]} {
    %c0 = arith.constant 0 : index
    %c0_0 = arith.constant 0 : index
    %0 = vector.load %arg1[%c0, %c0_0] : memref<2x8xf32, #tpu.memory_space<vmem>>, vector<2x8xf32>
    %c0_1 = arith.constant 0 : index
    %c0_2 = arith.constant 0 : index
    %1 = vector.load %arg2[%c0_1, %c0_2] : memref<8x512xf32, #tpu.memory_space<vmem>>, vector<8x512xf32>
    %cst = arith.constant dense<0.000000e+00> : vector<2x512xf32>
    %2 = tpu.matmul %0, %1, %cst {dimension_numbers = #tpu.dot_dimension_numbers<[1], [0], [0], [1], [0, 0, 1, 1], [], []>} : vector<2x8xf32>, vector<8x512xf32>, vector<2x512xf32> -> vector<2x512xf32>
    %c0_3 = arith.constant 0 : index
    %c0_4 = arith.constant 0 : index
    %3 = vector.load %arg3[%c0_3, %c0_4] : memref<1x512xf32, #tpu.memory_space<vmem>>, vector<1x512xf32>
    %4 = vector.broadcast %3 : vector<1x512xf32> to vector<2x512xf32>
    %5 = arith.addf %2, %4 : vector<2x512xf32>
    %c0_5 = arith.constant 0 : index
    %c0_6 = arith.constant 0 : index
    %6 = vector.load %arg4[%c0_5, %c0_6] : memref<1x512xf32, #tpu.memory_space<vmem>>, vector<1x512xf32>
    %c0_7 = arith.constant 0 : index
    %c0_8 = arith.constant 0 : index
    %7 = vector.load %arg5[%c0_7, %c0_8] : memref<1x512xf32, #tpu.memory_space<vmem>>, vector<1x512xf32>
    %cst_9 = arith.constant dense<0.000000e+00> : vector<2xf32>
    %8 = vector.multi_reduction <add>, %5, %cst_9 [1] : vector<2x512xf32> to vector<2xf32>
    %9 = vector.shape_cast %8 : vector<2xf32> to vector<2x1xf32>
    %cst_10 = arith.constant 2.500000e-03 : f32
    %10 = vector.broadcast %cst_10 : f32 to vector<2x1xf32>
    %11 = arith.mulf %9, %10 : vector<2x1xf32>
    %12 = arith.mulf %5, %5 : vector<2x512xf32>
    %cst_11 = arith.constant dense<0.000000e+00> : vector<2xf32>
    %13 = vector.multi_reduction <add>, %12, %cst_11 [1] : vector<2x512xf32> to vector<2xf32>
    %14 = vector.shape_cast %13 : vector<2xf32> to vector<2x1xf32>
    %cst_12 = arith.constant 2.500000e-03 : f32
    %15 = vector.broadcast %cst_12 : f32 to vector<2x1xf32>
    %16 = arith.mulf %14, %15 : vector<2x1xf32>
    %17 = arith.mulf %11, %11 : vector<2x1xf32>
    %18 = arith.subf %16, %17 : vector<2x1xf32>
    %cst_13 = arith.constant 0.000000e+00 : f32
    %19 = vector.broadcast %cst_13 : f32 to vector<2x1xf32>
    %20 = arith.maximumf %18, %19 : vector<2x1xf32>
    %21 = vector.broadcast %11 : vector<2x1xf32> to vector<2x512xf32>
    %22 = arith.subf %5, %21 : vector<2x512xf32>
    %cst_14 = arith.constant 9.99999974E-6 : f32
    %23 = vector.broadcast %cst_14 : f32 to vector<2x1xf32>
    %24 = arith.addf %20, %23 : vector<2x1xf32>
    %25 = math.rsqrt %24 : vector<2x1xf32>
    %26 = vector.broadcast %25 : vector<2x1xf32> to vector<2x512xf32>
    %27 = arith.mulf %22, %26 : vector<2x512xf32>
    %28 = vector.broadcast %6 : vector<1x512xf32> to vector<2x512xf32>
    %29 = arith.mulf %27, %28 : vector<2x512xf32>
    %30 = vector.broadcast %7 : vector<1x512xf32> to vector<2x512xf32>
    %31 = arith.addf %29, %30 : vector<2x512xf32>
    %cst_15 = arith.constant 0.000000e+00 : f32
    %32 = vector.broadcast %cst_15 : f32 to vector<2x512xf32>
    %33 = arith.maximumf %31, %32 : vector<2x512xf32>
    %c0_16 = arith.constant 0 : index
    %c0_17 = arith.constant 0 : index
    %34 = vector.load %arg6[%c0_16, %c0_17] : memref<512x384xf32, #tpu.memory_space<vmem>>, vector<512x384xf32>
    %cst_18 = arith.constant dense<0.000000e+00> : vector<2x384xf32>
    %35 = tpu.matmul %33, %34, %cst_18 {dimension_numbers = #tpu.dot_dimension_numbers<[1], [0], [0], [1], [0, 0, 1, 1], [], []>} : vector<2x512xf32>, vector<512x384xf32>, vector<2x384xf32> -> vector<2x384xf32>
    %c0_19 = arith.constant 0 : index
    %c0_20 = arith.constant 0 : index
    %36 = vector.load %arg7[%c0_19, %c0_20] : memref<1x384xf32, #tpu.memory_space<vmem>>, vector<1x384xf32>
    %37 = vector.broadcast %36 : vector<1x384xf32> to vector<2x384xf32>
    %38 = arith.addf %35, %37 : vector<2x384xf32>
    %c0_21 = arith.constant 0 : index
    %c0_22 = arith.constant 0 : index
    %39 = vector.load %arg8[%c0_21, %c0_22] : memref<1x384xf32, #tpu.memory_space<vmem>>, vector<1x384xf32>
    %c0_23 = arith.constant 0 : index
    %c0_24 = arith.constant 0 : index
    %40 = vector.load %arg9[%c0_23, %c0_24] : memref<1x384xf32, #tpu.memory_space<vmem>>, vector<1x384xf32>
    %cst_25 = arith.constant dense<0.000000e+00> : vector<2xf32>
    %41 = vector.multi_reduction <add>, %38, %cst_25 [1] : vector<2x384xf32> to vector<2xf32>
    %42 = vector.shape_cast %41 : vector<2xf32> to vector<2x1xf32>
    %cst_26 = arith.constant 0.00333333341 : f32
    %43 = vector.broadcast %cst_26 : f32 to vector<2x1xf32>
    %44 = arith.mulf %42, %43 : vector<2x1xf32>
    %45 = arith.mulf %38, %38 : vector<2x384xf32>
    %cst_27 = arith.constant dense<0.000000e+00> : vector<2xf32>
    %46 = vector.multi_reduction <add>, %45, %cst_27 [1] : vector<2x384xf32> to vector<2xf32>
    %47 = vector.shape_cast %46 : vector<2xf32> to vector<2x1xf32>
    %cst_28 = arith.constant 0.00333333341 : f32
    %48 = vector.broadcast %cst_28 : f32 to vector<2x1xf32>
    %49 = arith.mulf %47, %48 : vector<2x1xf32>
    %50 = arith.mulf %44, %44 : vector<2x1xf32>
    %51 = arith.subf %49, %50 : vector<2x1xf32>
    %cst_29 = arith.constant 0.000000e+00 : f32
    %52 = vector.broadcast %cst_29 : f32 to vector<2x1xf32>
    %53 = arith.maximumf %51, %52 : vector<2x1xf32>
    %54 = vector.broadcast %44 : vector<2x1xf32> to vector<2x384xf32>
    %55 = arith.subf %38, %54 : vector<2x384xf32>
    %cst_30 = arith.constant 9.99999974E-6 : f32
    %56 = vector.broadcast %cst_30 : f32 to vector<2x1xf32>
    %57 = arith.addf %53, %56 : vector<2x1xf32>
    %58 = math.rsqrt %57 : vector<2x1xf32>
    %59 = vector.broadcast %58 : vector<2x1xf32> to vector<2x384xf32>
    %60 = arith.mulf %55, %59 : vector<2x384xf32>
    %61 = vector.broadcast %39 : vector<1x384xf32> to vector<2x384xf32>
    %62 = arith.mulf %60, %61 : vector<2x384xf32>
    %63 = vector.broadcast %40 : vector<1x384xf32> to vector<2x384xf32>
    %64 = arith.addf %62, %63 : vector<2x384xf32>
    %cst_31 = arith.constant 0.000000e+00 : f32
    %65 = vector.broadcast %cst_31 : f32 to vector<2x384xf32>
    %66 = arith.maximumf %64, %65 : vector<2x384xf32>
    %c0_32 = arith.constant 0 : index
    %c0_33 = arith.constant 0 : index
    %67 = vector.load %arg10[%c0_32, %c0_33] : memref<384x128xf32, #tpu.memory_space<vmem>>, vector<384x128xf32>
    %cst_34 = arith.constant dense<0.000000e+00> : vector<2x128xf32>
    %68 = tpu.matmul %66, %67, %cst_34 {dimension_numbers = #tpu.dot_dimension_numbers<[1], [0], [0], [1], [0, 0, 1, 1], [], []>} : vector<2x384xf32>, vector<384x128xf32>, vector<2x128xf32> -> vector<2x128xf32>
    %c0_35 = arith.constant 0 : index
    %c0_36 = arith.constant 0 : index
    %69 = vector.load %arg11[%c0_35, %c0_36] : memref<1x128xf32, #tpu.memory_space<vmem>>, vector<1x128xf32>
    %70 = vector.broadcast %69 : vector<1x128xf32> to vector<2x128xf32>
    %71 = arith.addf %68, %70 : vector<2x128xf32>
    %72 = math.tanh %71 : vector<2x128xf32>
    %c0_37 = arith.constant 0 : index
    %c0_38 = arith.constant 0 : index
    %73 = vector.load %arg12[%c0_37, %c0_38] : memref<2x128xf32, #tpu.memory_space<vmem>>, vector<2x128xf32>
    tpu.vector_store %arg12[%c0_37, %c0_38], %72 {strides = array<i32>} : memref<2x128xf32, #tpu.memory_space<vmem>>, vector<2x128xf32>,
    return
  }
  func.func @transform_0(%arg0: i32) -> (i32, i32) {
    %c0_i32 = arith.constant 0 : i32
    %c0_i32_0 = arith.constant 0 : i32
    return %arg0, %c0_i32 : i32, i32
  }
  func.func @transform_1(%arg0: i32) -> (i32, i32) {
    %c0_i32 = arith.constant 0 : i32
    %c0_i32_0 = arith.constant 0 : i32
    %c0_i32_1 = arith.constant 0 : i32
    return %c0_i32, %c0_i32_0 : i32, i32
  }
  func.func @transform_2(%arg0: i32) -> (i32, i32) {
    %c0_i32 = arith.constant 0 : i32
    %c0_i32_0 = arith.constant 0 : i32
    %c0_i32_1 = arith.constant 0 : i32
    return %c0_i32, %c0_i32_0 : i32, i32
  }
  func.func @transform_3(%arg0: i32) -> (i32, i32) {
    %c0_i32 = arith.constant 0 : i32
    %c0_i32_0 = arith.constant 0 : i32
    %c0_i32_1 = arith.constant 0 : i32
    return %c0_i32, %c0_i32_0 : i32, i32
  }
  func.func @transform_4(%arg0: i32) -> (i32, i32) {
    %c0_i32 = arith.constant 0 : i32
    %c0_i32_0 = arith.constant 0 : i32
    %c0_i32_1 = arith.constant 0 : i32
    return %c0_i32, %c0_i32_0 : i32, i32
  }
  func.func @transform_5(%arg0: i32) -> (i32, i32) {
    %c0_i32 = arith.constant 0 : i32
    %c0_i32_0 = arith.constant 0 : i32
    %c0_i32_1 = arith.constant 0 : i32
    return %c0_i32, %c0_i32_0 : i32, i32
  }
  func.func @transform_6(%arg0: i32) -> (i32, i32) {
    %c0_i32 = arith.constant 0 : i32
    %c0_i32_0 = arith.constant 0 : i32
    %c0_i32_1 = arith.constant 0 : i32
    return %c0_i32, %c0_i32_0 : i32, i32
  }
  func.func @transform_7(%arg0: i32) -> (i32, i32) {
    %c0_i32 = arith.constant 0 : i32
    %c0_i32_0 = arith.constant 0 : i32
    %c0_i32_1 = arith.constant 0 : i32
    return %c0_i32, %c0_i32_0 : i32, i32
  }
  func.func @transform_8(%arg0: i32) -> (i32, i32) {
    %c0_i32 = arith.constant 0 : i32
    %c0_i32_0 = arith.constant 0 : i32
    %c0_i32_1 = arith.constant 0 : i32
    return %c0_i32, %c0_i32_0 : i32, i32
  }
  func.func @transform_9(%arg0: i32) -> (i32, i32) {
    %c0_i32 = arith.constant 0 : i32
    %c0_i32_0 = arith.constant 0 : i32
    %c0_i32_1 = arith.constant 0 : i32
    return %c0_i32, %c0_i32_0 : i32, i32
  }
  func.func @transform_10(%arg0: i32) -> (i32, i32) {
    %c0_i32 = arith.constant 0 : i32
    %c0_i32_0 = arith.constant 0 : i32
    %c0_i32_1 = arith.constant 0 : i32
    return %c0_i32, %c0_i32_0 : i32, i32
  }
  func.func @transform_11(%arg0: i32) -> (i32, i32) {
    %c0_i32 = arith.constant 0 : i32
    %c0_i32_0 = arith.constant 0 : i32
    return %arg0, %c0_i32 : i32, i32
  }
}

</mosaic_0001>

<llo_original>
// kernel: tpu_custom_call.1
$region0: #{tpu_custom_call.1}
  #allocation0 [shape = 'u32[]', space=smem, size = 0x4, offset = 0x4, fixed_abs, tag = 'smem constant byte address 0x4 - core index']
  #allocation1 [shape = 'u32[144,128]{1,0:T(1,128)}', space=vmem, size = 0x12000, scoped, tag = 'internal scratch']
  %s0 = inlined_call_operand.hbm [shape: f32[2,8], index: 0, kind: input, shape index: {}]
  %s1 = inlined_call_operand.hbm [shape: f32[8,512], index: 1, kind: input, shape index: {}]
  %s2 = inlined_call_operand.vmem [shape: f32[1,512], index: 2, kind: input, shape index: {}]
  %s3 = inlined_call_operand.vmem [shape: f32[1,512], index: 3, kind: input, shape index: {}]
  %s4 = inlined_call_operand.vmem [shape: f32[1,512], index: 4, kind: input, shape index: {}]
  %s5 = inlined_call_operand.hbm [shape: f32[512,384], index: 5, kind: input, shape index: {}]
  %s6 = inlined_call_operand.vmem [shape: f32[1,384], index: 6, kind: input, shape index: {}]
  %s7 = inlined_call_operand.vmem [shape: f32[1,384], index: 7, kind: input, shape index: {}]
  %s8 = inlined_call_operand.vmem [shape: f32[1,384], index: 8, kind: input, shape index: {}]
  %s9 = inlined_call_operand.hbm [shape: f32[384,128], index: 9, kind: input, shape index: {}]
  %s10 = inlined_call_operand.vmem [shape: f32[1,128], index: 10, kind: input, shape index: {}]
  %s11 = inlined_call_operand.hbm [shape: f32[2,128], index: 11, kind: output, shape index: {}]
  %s12 = sld [smem:[#allocation0]]
  $region70: #{tpu_custom_call.1} parent=0
    _
  %s14 = ssub.s32 1, %s12
  %s15 = scalar_select 0, %s14, %s12
  $region1: #{tpu_custom_call.1} parent=0
    #allocation2 [shape = 'u8[1024]{0}', space=vmem, size = 0x400, scoped, tag = 'input window, operand 0, single buffered']
    #allocation3 [shape = 's32[1]{0}', space=sflag, size = 0x4, scoped, tag = 'scoped memory for tpu_custom_call.1']
    #allocation4 [shape = 's32[1]{0}', space=sflag, size = 0x4, scoped, tag = 'scoped memory for tpu_custom_call.1']
    #allocation5 [shape = 'u8[16384]{0}', space=vmem, size = 0x4000, scoped, tag = 'input window, operand 1, single buffered']
    #allocation6 [shape = 's32[1]{0}', space=sflag, size = 0x4, scoped, tag = 'scoped memory for tpu_custom_call.1']
    #allocation7 [shape = 'u8[786432]{0}', space=vmem, size = 0xc0000, scoped, tag = 'input window, operand 5, single buffered']
    #allocation8 [shape = 'u8[196608]{0}', space=vmem, size = 0x30000, scoped, tag = 'input window, operand 9, single buffered']
    #allocation9 [shape = 's32[1]{0}', space=sflag, size = 0x4, scoped, tag = 'scoped memory for tpu_custom_call.1']
    #allocation10 [shape = 'u8[1024]{0}', space=vmem, size = 0x400, scoped, tag = 'output window, operand 0, single buffered']
    %16 = vsyncpa [#allocation3], 0
    %17 = vsyncpa [#allocation6], 0
    %18 = vsyncpa [#allocation9], 0
    %19 = vsyncpa [#allocation4], 0
    // Predicated region
    $region2: #{tpu_custom_call.1} parent=1 // pred_check
      _
    $region3: #{tpu_custom_call.1} parent=1 // pred_check_branch
      %21 = sbr.rel (0) target = $region5
    $region4: #{tpu_custom_call.1} parent=1 // pred_region
      %s23 = ssub.s32 32, 32
      %24 = vsyncadd [#allocation3], %s23
      %s26 = sshll.u32 [#allocation2], 4
      %s27 = int_to_ptr.vmem [resolvable:$true] %s26
      %29 = dma.hbm_to_vmem [thread:$0]  %s0, 32, %s27, [#allocation3]
    $region5: #{tpu_custom_call.1} parent=1 // pred_fallthru
      _
    // Predicated region
    $region6: #{tpu_custom_call.1} parent=1 // pred_check
      _
    $region7: #{tpu_custom_call.1} parent=1 // pred_check_branch
      %31 = sbr.rel (0) target = $region9
    $region8: #{tpu_custom_call.1} parent=1 // pred_region
      %s33 = ssub.s32 512, 512
      %34 = vsyncadd [#allocation6], %s33
      %s36 = sshll.u32 [#allocation5], 4
      %s37 = int_to_ptr.vmem [resolvable:$true] %s36
      %39 = dma.hbm_to_vmem [thread:$0]  %s1, 512, %s37, [#allocation6]
    $region9: #{tpu_custom_call.1} parent=1 // pred_fallthru
      _
    // Predicated region
    $region10: #{tpu_custom_call.1} parent=1 // pred_check
      _
    $region11: #{tpu_custom_call.1} parent=1 // pred_check_branch
      %41 = sbr.rel (0) target = $region13
    $region12: #{tpu_custom_call.1} parent=1 // pred_region
      _
    $region13: #{tpu_custom_call.1} parent=1 // pred_fallthru
      _
    // Predicated region
    $region14: #{tpu_custom_call.1} parent=1 // pred_check
      _
    $region15: #{tpu_custom_call.1} parent=1 // pred_check_branch
      %43 = sbr.rel (0) target = $region17
    $region16: #{tpu_custom_call.1} parent=1 // pred_region
      _
    $region17: #{tpu_custom_call.1} parent=1 // pred_fallthru
      _
    // Predicated region
    $region18: #{tpu_custom_call.1} parent=1 // pred_check
      _
    $region19: #{tpu_custom_call.1} parent=1 // pred_check_branch
      %45 = sbr.rel (0) target = $region21
    $region20: #{tpu_custom_call.1} parent=1 // pred_region
      _
    $region21: #{tpu_custom_call.1} parent=1 // pred_fallthru
      _
    // Predicated region
    $region22: #{tpu_custom_call.1} parent=1 // pred_check
      _
    $region23: #{tpu_custom_call.1} parent=1 // pred_check_branch
      %47 = sbr.rel (0) target = $region25
    $region24: #{tpu_custom_call.1} parent=1 // pred_region
      %s49 = ssub.s32 24576, 24576
      %50 = vsyncadd [#allocation6], %s49
      %s51 = sshll.u32 [#allocation7], 4
      %s52 = int_to_ptr.vmem [resolvable:$true] %s51
      %57 = dma.hbm_to_vmem [thread:$0]  %s5, 24576, %s52, [#allocation6], 384, 384, 24
    $region25: #{tpu_custom_call.1} parent=1 // pred_fallthru
      _
    // Predicated region
    $region26: #{tpu_custom_call.1} parent=1 // pred_check
      _
    $region27: #{tpu_custom_call.1} parent=1 // pred_check_branch
      %59 = sbr.rel (0) target = $region29
    $region28: #{tpu_custom_call.1} parent=1 // pred_region
      _
    $region29: #{tpu_custom_call.1} parent=1 // pred_fallthru
      _
    // Predicated region
    $region30: #{tpu_custom_call.1} parent=1 // pred_check
      _
    $region31: #{tpu_custom_call.1} parent=1 // pred_check_branch
      %61 = sbr.rel (0) target = $region33
    $region32: #{tpu_custom_call.1} parent=1 // pred_region
      _
    $region33: #{tpu_custom_call.1} parent=1 // pred_fallthru
      _
    // Predicated region
    $region34: #{tpu_custom_call.1} parent=1 // pred_check
      _
    $region35: #{tpu_custom_call.1} parent=1 // pred_check_branch
      %63 = sbr.rel (0) target = $region37
    $region36: #{tpu_custom_call.1} parent=1 // pred_region
      _
    $region37: #{tpu_custom_call.1} parent=1 // pred_fallthru
      _
    // Predicated region
    $region38: #{tpu_custom_call.1} parent=1 // pred_check
      _
    $region39: #{tpu_custom_call.1} parent=1 // pred_check_branch
      %65 = sbr.rel (0) target = $region41
    $region40: #{tpu_custom_call.1} parent=1 // pred_region
      %s67 = ssub.s32 6144, 6144
      %68 = vsyncadd [#allocation9], %s67
      %s69 = sshll.u32 [#allocation8], 4
      %s70 = int_to_ptr.vmem [resolvable:$true] %s69
      %75 = dma.hbm_to_vmem [thread:$0]  %s9, 6144, %s70, [#allocation9], 128, 128, 8
    $region41: #{tpu_custom_call.1} parent=1 // pred_fallthru
      _
    // Predicated region
    $region42: #{tpu_custom_call.1} parent=1 // pred_check
      _
    $region43: #{tpu_custom_call.1} parent=1 // pred_check_branch
      %77 = sbr.rel (0) target = $region45
    $region44: #{tpu_custom_call.1} parent=1 // pred_region
      _
    $region45: #{tpu_custom_call.1} parent=1 // pred_fallthru
      _
    // Predicated region
    $region46: #{tpu_custom_call.1} parent=1 // pred_check
      _
    $region47: #{tpu_custom_call.1} parent=1 // pred_check_branch
      %79 = sbr.rel (0) target = $region49
    $region48: #{tpu_custom_call.1} parent=1 // pred_region
      %80 = dma.done [#allocation3], 32
    $region49: #{tpu_custom_call.1} parent=1 // pred_fallthru
      _
    // Predicated region
    $region50: #{tpu_custom_call.1} parent=1 // pred_check
      _
    $region51: #{tpu_custom_call.1} parent=1 // pred_check_branch
      %82 = sbr.rel (0) target = $region53
    $region52: #{tpu_custom_call.1} parent=1 // pred_region
      %83 = dma.done [#allocation6], 512
    $region53: #{tpu_custom_call.1} parent=1 // pred_fallthru
      _
    // Predicated region
    $region54: #{tpu_custom_call.1} parent=1 // pred_check
      _
    $region55: #{tpu_custom_call.1} parent=1 // pred_check_branch
      %85 = sbr.rel (0) target = $region57
    $region56: #{tpu_custom_call.1} parent=1 // pred_region
      %86 = dma.done [#allocation6], 24576
    $region57: #{tpu_custom_call.1} parent=1 // pred_fallthru
      _
    // Predicated region
    $region58: #{tpu_custom_call.1} parent=1 // pred_check
      _
    $region59: #{tpu_custom_call.1} parent=1 // pred_check_branch
      %88 = sbr.rel (0) target = $region61
    $region60: #{tpu_custom_call.1} parent=1 // pred_region
      %89 = dma.done [#allocation9], 6144
    $region61: #{tpu_custom_call.1} parent=1 // pred_fallthru
      _
    %v90 = vld [vmem:[#allocation2] sm:$0x3]
    %v91 = vld [vmem:[#allocation5] sm:$0xff]
    %v92 = vld [vmem:[#allocation5 + $0x8] sm:$0xff]
    %v93 = vld [vmem:[#allocation5 + $0x10] sm:$0xff]
    %v94 = vld [vmem:[#allocation5 + $0x18] sm:$0xff]
    %v95 = vld [vmem:[%s2] sm:$0xf]
    %v97 = vlaneseq
    %v98 = vshrl.u32 %v97, 7
    %v99 = vsub.s32 0, %v98
    %v100 = vrot.slane %v95, %v99
    %v101 = vlaneseq
    %v102 = vshrl.u32 %v101, 7
    %v103 = vsub.s32 1, %v102
    %v104 = vrot.slane %v95, %v103
    %v105 = vlaneseq
    %v106 = vshrl.u32 %v105, 7
    %v107 = vsub.s32 2, %v106
    %v108 = vrot.slane %v95, %v107
    %v109 = vlaneseq
    %v110 = vshrl.u32 %v109, 7
    %v111 = vsub.s32 3, %v110
    %v112 = vrot.slane %v95, %v111
    %vm117 = vcmask 64512
    %v119 = vsel %vm117, %v90, 0
    %121 = vmatprep.subr.mxu0 %v92
    %122 = vmatpush1.msra.mxu0 %v91
    %123 = vmatprep.subr.mxu0 0.0
    %124 = vmatpush1.msra.mxu0 0.0
    %125 = vmatprep.subr.mxu0 0.0
    %126 = vmatpush1.msra.mxu0 0.0
    %127 = vmatprep.subr.mxu0 0.0
    %128 = vmatpush1.msra.mxu0 0.0
    %129 = vmatprep.subr.mxu0 0.0
    %130 = vmatpush1.msra.mxu0 0.0
    %131 = vmatprep.subr.mxu0 0.0
    %132 = vmatpush1.msra.mxu0 0.0
    %133 = vmatprep.subr.mxu0 0.0
    %134 = vmatpush1.msra.mxu0 0.0
    %135 = vmatprep.subr.mxu0 0.0
    %136 = vmatpush1.msra.mxu0 0.0
    %137 = vmatprep.subr.mxu0 0.0
    %138 = vmatpush1.msra.mxu0 0.0
    %139 = vmatprep.subr.mxu0 0.0
    %140 = vmatpush1.msra.mxu0 0.0
    %141 = vmatprep.subr.mxu0 0.0
    %142 = vmatpush1.msra.mxu0 0.0
    %143 = vmatprep.subr.mxu0 0.0
    %144 = vmatpush1.msra.mxu0 0.0
    %145 = vmatprep.subr.mxu0 0.0
    %146 = vmatpush1.msra.mxu0 0.0
    %147 = vmatprep.subr.mxu0 0.0
    %148 = vmatpush1.msra.mxu0 0.0
    %149 = vmatprep.subr.mxu0 0.0
    %150 = vmatpush1.msra.mxu0 0.0
    %151 = vmatprep.subr.mxu0 0.0
    %152 = vmatpush1.msra.mxu0 0.0
    %153 = vmatprep.subr.mxu0 0.0
    %154 = vmatpush1.msra.mxu0 0.0
    %155 = vmatprep.subr.mxu0 0.0
    %156 = vmatpush1.msra.mxu0 0.0
    %157 = vmatprep.subr.mxu0 0.0
    %158 = vmatpush1.msra.mxu0 0.0
    %159 = vmatprep.subr.mxu0 0.0
    %160 = vmatpush1.msra.mxu0 0.0
    %161 = vmatprep.subr.mxu0 0.0
    %162 = vmatpush1.msra.mxu0 0.0
    %163 = vmatprep.subr.mxu0 0.0
    %164 = vmatpush1.msra.mxu0 0.0
    %165 = vmatprep.subr.mxu0 0.0
    %166 = vmatpush1.msra.mxu0 0.0
    %167 = vmatprep.subr.mxu0 0.0
    %168 = vmatpush1.msra.mxu0 0.0
    %169 = vmatprep.subr.mxu0 0.0
    %170 = vmatpush1.msra.mxu0 0.0
    %171 = vmatprep.subr.mxu0 0.0
    %172 = vmatpush1.msra.mxu0 0.0
    %173 = vmatprep.subr.mxu0 0.0
    %174 = vmatpush1.msra.mxu0 0.0
    %175 = vmatprep.subr.mxu0 0.0
    %176 = vmatpush1.msra.mxu0 0.0
    %177 = vmatprep.subr.mxu0 0.0
    %178 = vmatpush1.msra.mxu0 0.0
    %179 = vmatprep.subr.mxu0 0.0
    %180 = vmatpush1.msra.mxu0 0.0
    %181 = vmatprep.subr.mxu0 0.0
    %182 = vmatpush1.msra.mxu0 0.0
    %183 = vmatprep.subr.mxu0 0.0
    %184 = vmatpush1.msra.mxu0 0.0
    %185 = vmatprep.mubr.f32.mxu0 0.0
    %186 = vmatmul.mubr.f32.gmra.mrb[0].mxu0 %v119
    %v187 = vpop.f32.mrb[0].mxu0
    %v188 = vadd.f32 %v100, %v187
    %v189 = vpop.f32.mrb[0].mxu0
    %v190 = vadd.f32 %v104, %v189
    %191 = vdwg.mxu0
    %192 = vmatprep.subr.mxu0 %v94
    %193 = vmatpush1.msra.mxu0 %v93
    %194 = vmatprep.subr.mxu0 0.0
    %195 = vmatpush1.msra.mxu0 0.0
    %196 = vmatprep.subr.mxu0 0.0
    %197 = vmatpush1.msra.mxu0 0.0
    %198 = vmatprep.subr.mxu0 0.0
    %199 = vmatpush1.msra.mxu0 0.0
    %200 = vmatprep.subr.mxu0 0.0
    %201 = vmatpush1.msra.mxu0 0.0
    %202 = vmatprep.subr.mxu0 0.0
    %203 = vmatpush1.msra.mxu0 0.0
    %204 = vmatprep.subr.mxu0 0.0
    %205 = vmatpush1.msra.mxu0 0.0
    %206 = vmatprep.subr.mxu0 0.0
    %207 = vmatpush1.msra.mxu0 0.0
    %208 = vmatprep.subr.mxu0 0.0
    %209 = vmatpush1.msra.mxu0 0.0
    %210 = vmatprep.subr.mxu0 0.0
    %211 = vmatpush1.msra.mxu0 0.0
    %212 = vmatprep.subr.mxu0 0.0
    %213 = vmatpush1.msra.mxu0 0.0
    %214 = vmatprep.subr.mxu0 0.0
    %215 = vmatpush1.msra.mxu0 0.0
    %216 = vmatprep.subr.mxu0 0.0
    %217 = vmatpush1.msra.mxu0 0.0
    %218 = vmatprep.subr.mxu0 0.0
    %219 = vmatpush1.msra.mxu0 0.0
    %220 = vmatprep.subr.mxu0 0.0
    %221 = vmatpush1.msra.mxu0 0.0
    %222 = vmatprep.subr.mxu0 0.0
    %223 = vmatpush1.msra.mxu0 0.0
    %224 = vmatprep.subr.mxu0 0.0
    %225 = vmatpush1.msra.mxu0 0.0
    %226 = vmatprep.subr.mxu0 0.0
    %227 = vmatpush1.msra.mxu0 0.0
    %228 = vmatprep.subr.mxu0 0.0
    %229 = vmatpush1.msra.mxu0 0.0
    %230 = vmatprep.subr.mxu0 0.0
    %231 = vmatpush1.msra.mxu0 0.0
    %232 = vmatprep.subr.mxu0 0.0
    %233 = vmatpush1.msra.mxu0 0.0
    %234 = vmatprep.subr.mxu0 0.0
    %235 = vmatpush1.msra.mxu0 0.0
    %236 = vmatprep.subr.mxu0 0.0
    %237 = vmatpush1.msra.mxu0 0.0
    %238 = vmatprep.subr.mxu0 0.0
    %239 = vmatpush1.msra.mxu0 0.0
    %240 = vmatprep.subr.mxu0 0.0
    %241 = vmatpush1.msra.mxu0 0.0
    %242 = vmatprep.subr.mxu0 0.0
    %243 = vmatpush1.msra.mxu0 0.0
    %244 = vmatprep.subr.mxu0 0.0
    %245 = vmatpush1.msra.mxu0 0.0
    %246 = vmatprep.subr.mxu0 0.0
    %247 = vmatpush1.msra.mxu0 0.0
    %248 = vmatprep.subr.mxu0 0.0
    %249 = vmatpush1.msra.mxu0 0.0
    %250 = vmatprep.subr.mxu0 0.0
    %251 = vmatpush1.msra.mxu0 0.0
    %252 = vmatprep.subr.mxu0 0.0
    %253 = vmatpush1.msra.mxu0 0.0
    %254 = vmatprep.subr.mxu0 0.0
    %255 = vmatpush1.msra.mxu0 0.0
    %256 = vmatprep.mubr.f32.mxu0 0.0
    %257 = vmatmul.mubr.f32.gmra.mrb[0].mxu0 %v119
    %v258 = vpop.f32.mrb[0].mxu0
    %v259 = vadd.f32 %v108, %v258
    %v260 = vpop.f32.mrb[0].mxu0
    %v261 = vadd.f32 %v112, %v260
    %262 = vdwg.mxu0
    %v263 = vld [vmem:[%s3] sm:$0xf]
    %v264 = vld [vmem:[%s4] sm:$0xf]
    %vm265 = vcmask 1041408
    %v266 = vsel %vm265, %v188, 0.0
    %v267 = vsel %vm265, %v190, 0.0
    %v268 = vadd.f32 %v266, %v267
    %v269 = vsel %vm265, %v259, 0.0
    %v270 = vadd.f32 %v268, %v269
    %v271 = vsel %vm265, %v261, 0.0
    %v272 = vadd.f32 %v270, %v271
    %273 = vadd.xlane.f32.xlu0 %v272
    %v274 = vpop.xlane.xlu0 %273
    %v275 = vmul.f32 %v274, 0.0025
    %v276 = vmul.f32 %v188, %v188
    %v277 = vmul.f32 %v190, %v190
    %v278 = vmul.f32 %v259, %v259
    %v279 = vmul.f32 %v261, %v261
    %v280 = vsel %vm265, %v276, 0.0
    %v281 = vsel %vm265, %v277, 0.0
    %v282 = vadd.f32 %v280, %v281
    %v283 = vsel %vm265, %v278, 0.0
    %v284 = vadd.f32 %v282, %v283
    %v285 = vsel %vm265, %v279, 0.0
    %v286 = vadd.f32 %v284, %v285
    %287 = vadd.xlane.f32.xlu0 %v286
    %v288 = vpop.xlane.xlu0 %287
    %v289 = vmul.f32 %v288, 0.0025
    %v290 = vmul.f32 %v275, %v275
    %v291 = vsub.f32 %v289, %v290
    %v292 = vmax.f32 %v291, 0.0
    %v293 = vsub.f32 %v188, %v275
    %v294 = vsub.f32 %v190, %v275
    %v295 = vsub.f32 %v259, %v275
    %v296 = vsub.f32 %v261, %v275
    %v297 = vadd.f32 %v292, 1e-05
    %v298 = vrsqrt.pop %v297
    %v299 = vmul.f32 %v293, %v298
    %v300 = vmul.f32 %v294, %v298
    %v301 = vmul.f32 %v295, %v298
    %v302 = vmul.f32 %v296, %v298
    %v304 = vlaneseq
    %v305 = vshrl.u32 %v304, 7
    %v306 = vsub.s32 0, %v305
    %v307 = vrot.slane %v263, %v306
    %v308 = vlaneseq
    %v309 = vshrl.u32 %v308, 7
    %v310 = vsub.s32 1, %v309
    %v311 = vrot.slane %v263, %v310
    %v312 = vlaneseq
    %v313 = vshrl.u32 %v312, 7
    %v314 = vsub.s32 2, %v313
    %v315 = vrot.slane %v263, %v314
    %v316 = vlaneseq
    %v317 = vshrl.u32 %v316, 7
    %v318 = vsub.s32 3, %v317
    %v319 = vrot.slane %v263, %v318
    %v324 = vmul.f32 %v299, %v307
    %v325 = vmul.f32 %v300, %v311
    %v326 = vmul.f32 %v301, %v315
    %v327 = vmul.f32 %v302, %v319
    %v329 = vlaneseq
    %v330 = vshrl.u32 %v329, 7
    %v331 = vsub.s32 0, %v330
    %v332 = vrot.slane %v264, %v331
    %v333 = vlaneseq
    %v334 = vshrl.u32 %v333, 7
    %v335 = vsub.s32 1, %v334
    %v336 = vrot.slane %v264, %v335
    %v337 = vlaneseq
    %v338 = vshrl.u32 %v337, 7
    %v339 = vsub.s32 2, %v338
    %v340 = vrot.slane %v264, %v339
    %v341 = vlaneseq
    %v342 = vshrl.u32 %v341, 7
    %v343 = vsub.s32 3, %v342
    %v344 = vrot.slane %v264, %v343
    %v349 = vadd.f32 %v324, %v332
    %v350 = vadd.f32 %v325, %v336
    %v351 = vadd.f32 %v326, %v340
    %v352 = vadd.f32 %v327, %v344
    %v353 = vmax.f32 %v349, 0.0
    %v354 = vmax.f32 %v350, 0.0
    %v355 = vmax.f32 %v351, 0.0
    %v356 = vmax.f32 %v352, 0.0
    %v357 = vld [vmem:[#allocation7] sm:$0xff]
    %v358 = vld [vmem:[#allocation7 + $0x8] sm:$0xff]
    %v359 = vld [vmem:[#allocation7 + $0x10] sm:$0xff]
    %v360 = vld [vmem:[#allocation7 + $0x18] sm:$0xff]
    %v361 = vld [vmem:[#allocation7 + $0x20] sm:$0xff]
    %v362 = vld [vmem:[#allocation7 + $0x28] sm:$0xff]
    %v363 = vld [vmem:[#allocation7 + $0x30] sm:$0xff]
    %v364 = vld [vmem:[#allocation7 + $0x38] sm:$0xff]
    %v365 = vld [vmem:[#allocation7 + $0x40] sm:$0xff]
    %v366 = vld [vmem:[#allocation7 + $0x48] sm:$0xff]
    %v367 = vld [vmem:[#allocation7 + $0x50] sm:$0xff]
    %v368 = vld [vmem:[#allocation7 + $0x58] sm:$0xff]
    %v369 = vld [vmem:[#allocation7 + $0x60] sm:$0xff]
    %v370 = vld [vmem:[#allocation7 + $0x68] sm:$0xff]
    %v371 = vld [vmem:[#allocation7 + $0x70] sm:$0xff]
    %v372 = vld [vmem:[#allocation7 + $0x78] sm:$0xff]
    %v373 = vld [vmem:[#allocation7 + $0x80] sm:$0xff]
    %v374 = vld [vmem:[#allocation7 + $0x88] sm:$0xff]
    %v375 = vld [vmem:[#allocation7 + $0x90] sm:$0xff]
    %v376 = vld [vmem:[#allocation7 + $0x98] sm:$0xff]
    %v377 = vld [vmem:[#allocation7 + $0xa0] sm:$0xff]
    %v378 = vld [vmem:[#allocation7 + $0xa8] sm:$0xff]
    %v379 = vld [vmem:[#allocation7 + $0xb0] sm:$0xff]
    %v380 = vld [vmem:[#allocation7 + $0xb8] sm:$0xff]
    %v381 = vld [vmem:[#allocation7 + $0xc0] sm:$0xff]
    %v382 = vld [vmem:[#allocation7 + $0xc8] sm:$0xff]
    %v383 = vld [vmem:[#allocation7 + $0xd0] sm:$0xff]
    %v384 = vld [vmem:[#allocation7 + $0xd8] sm:$0xff]
    %v385 = vld [vmem:[#allocation7 + $0xe0] sm:$0xff]
    %v386 = vld [vmem:[#allocation7 + $0xe8] sm:$0xff]
    %v387 = vld [vmem:[#allocation7 + $0xf0] sm:$0xff]
    %v388 = vld [vmem:[#allocation7 + $0xf8] sm:$0xff]
    %v389 = vld [vmem:[#allocation7 + $0x100] sm:$0xff]
    %v390 = vld [vmem:[#allocation7 + $0x108] sm:$0xff]
    %v391 = vld [vmem:[#allocation7 + $0x110] sm:$0xff]
    %v392 = vld [vmem:[#allocation7 + $0x118] sm:$0xff]
    %v393 = vld [vmem:[#allocation7 + $0x120] sm:$0xff]
    %v394 = vld [vmem:[#allocation7 + $0x128] sm:$0xff]
    %v395 = vld [vmem:[#allocation7 + $0x130] sm:$0xff]
    %v396 = vld [vmem:[#allocation7 + $0x138] sm:$0xff]
    %v397 = vld [vmem:[#allocation7 + $0x140] sm:$0xff]
    %v398 = vld [vmem:[#allocation7 + $0x148] sm:$0xff]
    %v399 = vld [vmem:[#allocation7 + $0x150] sm:$0xff]
    %v400 = vld [vmem:[#allocation7 + $0x158] sm:$0xff]
    %v401 = vld [vmem:[#allocation7 + $0x160] sm:$0xff]
    %v402 = vld [vmem:[#allocation7 + $0x168] sm:$0xff]
    %v403 = vld [vmem:[#allocation7 + $0x170] sm:$0xff]
    %v404 = vld [vmem:[#allocation7 + $0x178] sm:$0xff]
    %v405 = vld [vmem:[#allocation7 + $0x180] sm:$0xff]
    %v406 = vld [vmem:[#allocation7 + $0x188] sm:$0xff]
    %v407 = vld [vmem:[#allocation7 + $0x190] sm:$0xff]
    %v408 = vld [vmem:[#allocation7 + $0x198] sm:$0xff]
    %v409 = vld [vmem:[#allocation7 + $0x1a0] sm:$0xff]
    %v410 = vld [vmem:[#allocation7 + $0x1a8] sm:$0xff]
    %v411 = vld [vmem:[#allocation7 + $0x1b0] sm:$0xff]
    %v412 = vld [vmem:[#allocation7 + $0x1b8] sm:$0xff]
    %v413 = vld [vmem:[#allocation7 + $0x1c0] sm:$0xff]
    %v414 = vld [vmem:[#allocation7 + $0x1c8] sm:$0xff]
    %v415 = vld [vmem:[#allocation7 + $0x1d0] sm:$0xff]
    %v416 = vld [vmem:[#allocation7 + $0x1d8] sm:$0xff]
    %v417 = vld [vmem:[#allocation7 + $0x1e0] sm:$0xff]
    %v418 = vld [vmem:[#allocation7 + $0x1e8] sm:$0xff]
    %v419 = vld [vmem:[#allocation7 + $0x1f0] sm:$0xff]
    %v420 = vld [vmem:[#allocation7 + $0x1f8] sm:$0xff]
    %v421 = vld [vmem:[#allocation7 + $0x200] sm:$0xff]
    %v422 = vld [vmem:[#allocation7 + $0x208] sm:$0xff]
    %v423 = vld [vmem:[#allocation7 + $0x210] sm:$0xff]
    %v424 = vld [vmem:[#allocation7 + $0x218] sm:$0xff]
    %v425 = vld [vmem:[#allocation7 + $0x220] sm:$0xff]
    %v426 = vld [vmem:[#allocation7 + $0x228] sm:$0xff]
    %v427 = vld [vmem:[#allocation7 + $0x230] sm:$0xff]
    %v428 = vld [vmem:[#allocation7 + $0x238] sm:$0xff]
    %v429 = vld [vmem:[#allocation7 + $0x240] sm:$0xff]
    %v430 = vld [vmem:[#allocation7 + $0x248] sm:$0xff]
    %v431 = vld [vmem:[#allocation7 + $0x250] sm:$0xff]
    %v432 = vld [vmem:[#allocation7 + $0x258] sm:$0xff]
    %v433 = vld [vmem:[#allocation7 + $0x260] sm:$0xff]
    %v434 = vld [vmem:[#allocation7 + $0x268] sm:$0xff]
    %v435 = vld [vmem:[#allocation7 + $0x270] sm:$0xff]
    %v436 = vld [vmem:[#allocation7 + $0x278] sm:$0xff]
    %v437 = vld [vmem:[#allocation7 + $0x280] sm:$0xff]
    %v438 = vld [vmem:[#allocation7 + $0x288] sm:$0xff]
    %v439 = vld [vmem:[#allocation7 + $0x290] sm:$0xff]
    %v440 = vld [vmem:[#allocation7 + $0x298] sm:$0xff]
    %v441 = vld [vmem:[#allocation7 + $0x2a0] sm:$0xff]
    %v442 = vld [vmem:[#allocation7 + $0x2a8] sm:$0xff]
    %v443 = vld [vmem:[#allocation7 + $0x2b0] sm:$0xff]
    %v444 = vld [vmem:[#allocation7 + $0x2b8] sm:$0xff]
    %v445 = vld [vmem:[#allocation7 + $0x2c0] sm:$0xff]
    %v446 = vld [vmem:[#allocation7 + $0x2c8] sm:$0xff]
    %v447 = vld [vmem:[#allocation7 + $0x2d0] sm:$0xff]
    %v448 = vld [vmem:[#allocation7 + $0x2d8] sm:$0xff]
    %v449 = vld [vmem:[#allocation7 + $0x2e0] sm:$0xff]
    %v450 = vld [vmem:[#allocation7 + $0x2e8] sm:$0xff]
    %v451 = vld [vmem:[#allocation7 + $0x2f0] sm:$0xff]
    %v452 = vld [vmem:[#allocation7 + $0x2f8] sm:$0xff]
    %v453 = vld [vmem:[#allocation7 + $0x300] sm:$0xff]
    %v454 = vld [vmem:[#allocation7 + $0x308] sm:$0xff]
    %v455 = vld [vmem:[#allocation7 + $0x310] sm:$0xff]
    %v456 = vld [vmem:[#allocation7 + $0x318] sm:$0xff]
    %v457 = vld [vmem:[#allocation7 + $0x320] sm:$0xff]
    %v458 = vld [vmem:[#allocation7 + $0x328] sm:$0xff]
    %v459 = vld [vmem:[#allocation7 + $0x330] sm:$0xff]
    %v460 = vld [vmem:[#allocation7 + $0x338] sm:$0xff]
    %v461 = vld [vmem:[#allocation7 + $0x340] sm:$0xff]
    %v462 = vld [vmem:[#allocation7 + $0x348] sm:$0xff]
    %v463 = vld [vmem:[#allocation7 + $0x350] sm:$0xff]
    %v464 = vld [vmem:[#allocation7 + $0x358] sm:$0xff]
    %v465 = vld [vmem:[#allocation7 + $0x360] sm:$0xff]
    %v466 = vld [vmem:[#allocation7 + $0x368] sm:$0xff]
    %v467 = vld [vmem:[#allocation7 + $0x370] sm:$0xff]
    %v468 = vld [vmem:[#allocation7 + $0x378] sm:$0xff]
    %v469 = vld [vmem:[#allocation7 + $0x380] sm:$0xff]
    %v470 = vld [vmem:[#allocation7 + $0x388] sm:$0xff]
    %v471 = vld [vmem:[#allocation7 + $0x390] sm:$0xff]
    %v472 = vld [vmem:[#allocation7 + $0x398] sm:$0xff]
    %v473 = vld [vmem:[#allocation7 + $0x3a0] sm:$0xff]
    %v474 = vld [vmem:[#allocation7 + $0x3a8] sm:$0xff]
    %v475 = vld [vmem:[#allocation7 + $0x3b0] sm:$0xff]
    %v476 = vld [vmem:[#allocation7 + $0x3b8] sm:$0xff]
    %v477 = vld [vmem:[#allocation7 + $0x3c0] sm:$0xff]
    %v478 = vld [vmem:[#allocation7 + $0x3c8] sm:$0xff]
    %v479 = vld [vmem:[#allocation7 + $0x3d0] sm:$0xff]
    %v480 = vld [vmem:[#allocation7 + $0x3d8] sm:$0xff]
    %v481 = vld [vmem:[#allocation7 + $0x3e0] sm:$0xff]
    %v482 = vld [vmem:[#allocation7 + $0x3e8] sm:$0xff]
    %v483 = vld [vmem:[#allocation7 + $0x3f0] sm:$0xff]
    %v484 = vld [vmem:[#allocation7 + $0x3f8] sm:$0xff]
    %v485 = vld [vmem:[#allocation7 + $0x400] sm:$0xff]
    %v486 = vld [vmem:[#allocation7 + $0x408] sm:$0xff]
    %v487 = vld [vmem:[#allocation7 + $0x410] sm:$0xff]
    %v488 = vld [vmem:[#allocation7 + $0x418] sm:$0xff]
    %v489 = vld [vmem:[#allocation7 + $0x420] sm:$0xff]
    %v490 = vld [vmem:[#allocation7 + $0x428] sm:$0xff]
    %v491 = vld [vmem:[#allocation7 + $0x430] sm:$0xff]
    %v492 = vld [vmem:[#allocation7 + $0x438] sm:$0xff]
    %v493 = vld [vmem:[#allocation7 + $0x440] sm:$0xff]
    %v494 = vld [vmem:[#allocation7 + $0x448] sm:$0xff]
    %v495 = vld [vmem:[#allocation7 + $0x450] sm:$0xff]
    %v496 = vld [vmem:[#allocation7 + $0x458] sm:$0xff]
    %v497 = vld [vmem:[#allocation7 + $0x460] sm:$0xff]
    %v498 = vld [vmem:[#allocation7 + $0x468] sm:$0xff]
    %v499 = vld [vmem:[#allocation7 + $0x470] sm:$0xff]
    %v500 = vld [vmem:[#allocation7 + $0x478] sm:$0xff]
    %v501 = vld [vmem:[#allocation7 + $0x480] sm:$0xff]
    %v502 = vld [vmem:[#allocation7 + $0x488] sm:$0xff]
    %v503 = vld [vmem:[#allocation7 + $0x490] sm:$0xff]
    %v504 = vld [vmem:[#allocation7 + $0x498] sm:$0xff]
    %v505 = vld [vmem:[#allocation7 + $0x4a0] sm:$0xff]
    %v506 = vld [vmem:[#allocation7 + $0x4a8] sm:$0xff]
    %v507 = vld [vmem:[#allocation7 + $0x4b0] sm:$0xff]
    %v508 = vld [vmem:[#allocation7 + $0x4b8] sm:$0xff]
    %v509 = vld [vmem:[#allocation7 + $0x4c0] sm:$0xff]
    %v510 = vld [vmem:[#allocation7 + $0x4c8] sm:$0xff]
    %v511 = vld [vmem:[#allocation7 + $0x4d0] sm:$0xff]
    %v512 = vld [vmem:[#allocation7 + $0x4d8] sm:$0xff]
    %v513 = vld [vmem:[#allocation7 + $0x4e0] sm:$0xff]
    %v514 = vld [vmem:[#allocation7 + $0x4e8] sm:$0xff]
    %v515 = vld [vmem:[#allocation7 + $0x4f0] sm:$0xff]
    %v516 = vld [vmem:[#allocation7 + $0x4f8] sm:$0xff]
    %v517 = vld [vmem:[#allocation7 + $0x500] sm:$0xff]
    %v518 = vld [vmem:[#allocation7 + $0x508] sm:$0xff]
    %v519 = vld [vmem:[#allocation7 + $0x510] sm:$0xff]
    %v520 = vld [vmem:[#allocation7 + $0x518] sm:$0xff]
    %v521 = vld [vmem:[#allocation7 + $0x520] sm:$0xff]
    %v522 = vld [vmem:[#allocation7 + $0x528] sm:$0xff]
    %v523 = vld [vmem:[#allocation7 + $0x530] sm:$0xff]
    %v524 = vld [vmem:[#allocation7 + $0x538] sm:$0xff]
    %v525 = vld [vmem:[#allocation7 + $0x540] sm:$0xff]
    %v526 = vld [vmem:[#allocation7 + $0x548] sm:$0xff]
    %v527 = vld [vmem:[#allocation7 + $0x550] sm:$0xff]
    %v528 = vld [vmem:[#allocation7 + $0x558] sm:$0xff]
    %v529 = vld [vmem:[#allocation7 + $0x560] sm:$0xff]
    %v530 = vld [vmem:[#allocation7 + $0x568] sm:$0xff]
    %v531 = vld [vmem:[#allocation7 + $0x570] sm:$0xff]
    %v532 = vld [vmem:[#allocation7 + $0x578] sm:$0xff]
    %v533 = vld [vmem:[#allocation7 + $0x580] sm:$0xff]
    %v534 = vld [vmem:[#allocation7 + $0x588] sm:$0xff]
    %v535 = vld [vmem:[#allocation7 + $0x590] sm:$0xff]
    %v536 = vld [vmem:[#allocation7 + $0x598] sm:$0xff]
    %v537 = vld [vmem:[#allocation7 + $0x5a0] sm:$0xff]
    %v538 = vld [vmem:[#allocation7 + $0x5a8] sm:$0xff]
    %v539 = vld [vmem:[#allocation7 + $0x5b0] sm:$0xff]
    %v540 = vld [vmem:[#allocation7 + $0x5b8] sm:$0xff]
    %v541 = vld [vmem:[#allocation7 + $0x5c0] sm:$0xff]
    %v542 = vld [vmem:[#allocation7 + $0x5c8] sm:$0xff]
    %v543 = vld [vmem:[#allocation7 + $0x5d0] sm:$0xff]
    %v544 = vld [vmem:[#allocation7 + $0x5d8] sm:$0xff]
    %v545 = vld [vmem:[#allocation7 + $0x5e0] sm:$0xff]
    %v546 = vld [vmem:[#allocation7 + $0x5e8] sm:$0xff]
    %v547 = vld [vmem:[#allocation7 + $0x5f0] sm:$0xff]
    %v548 = vld [vmem:[#allocation7 + $0x5f8] sm:$0xff]
    %v549 = vld [vmem:[%s6] sm:$0x7]
    %v551 = vlaneseq
    %v552 = vshrl.u32 %v551, 7
    %v553 = vsub.s32 0, %v552
    %v554 = vrot.slane %v549, %v553
    %v555 = vlaneseq
    %v556 = vshrl.u32 %v555, 7
    %v557 = vsub.s32 1, %v556
    %v558 = vrot.slane %v549, %v557
    %v559 = vlaneseq
    %v560 = vshrl.u32 %v559, 7
    %v561 = vsub.s32 2, %v560
    %v562 = vrot.slane %v549, %v561
    %566 = vmatprep.subr.mxu0 %v358
    %567 = vmatpush1.msra.mxu0 %v357
    %568 = vmatprep.subr.mxu0 %v361
    %569 = vmatpush1.msra.mxu0 %v360
    %570 = vmatprep.subr.mxu0 %v364
    %571 = vmatpush1.msra.mxu0 %v363
    %572 = vmatprep.subr.mxu0 %v367
    %573 = vmatpush1.msra.mxu0 %v366
    %574 = vmatprep.subr.mxu0 %v370
    %575 = vmatpush1.msra.mxu0 %v369
    %576 = vmatprep.subr.mxu0 %v373
    %577 = vmatpush1.msra.mxu0 %v372
    %578 = vmatprep.subr.mxu0 %v376
    %579 = vmatpush1.msra.mxu0 %v375
    %580 = vmatprep.subr.mxu0 %v379
    %581 = vmatpush1.msra.mxu0 %v378
    %582 = vmatprep.subr.mxu0 %v382
    %583 = vmatpush1.msra.mxu0 %v381
    %584 = vmatprep.subr.mxu0 %v385
    %585 = vmatpush1.msra.mxu0 %v384
    %586 = vmatprep.subr.mxu0 %v388
    %587 = vmatpush1.msra.mxu0 %v387
    %588 = vmatprep.subr.mxu0 %v391
    %589 = vmatpush1.msra.mxu0 %v390
    %590 = vmatprep.subr.mxu0 %v394
    %591 = vmatpush1.msra.mxu0 %v393
    %592 = vmatprep.subr.mxu0 %v397
    %593 = vmatpush1.msra.mxu0 %v396
    %594 = vmatprep.subr.mxu0 %v400
    %595 = vmatpush1.msra.mxu0 %v399
    %596 = vmatprep.subr.mxu0 %v403
    %597 = vmatpush1.msra.mxu0 %v402
    %598 = vmatprep.subr.mxu0 %v406
    %599 = vmatpush1.msra.mxu0 %v405
    %600 = vmatprep.subr.mxu0 %v409
    %601 = vmatpush1.msra.mxu0 %v408
    %602 = vmatprep.subr.mxu0 %v412
    %603 = vmatpush1.msra.mxu0 %v411
    %604 = vmatprep.subr.mxu0 %v415
    %605 = vmatpush1.msra.mxu0 %v414
    %606 = vmatprep.subr.mxu0 %v418
    %607 = vmatpush1.msra.mxu0 %v417
    %608 = vmatprep.subr.mxu0 %v421
    %609 = vmatpush1.msra.mxu0 %v420
    %610 = vmatprep.subr.mxu0 %v424
    %611 = vmatpush1.msra.mxu0 %v423
    %612 = vmatprep.subr.mxu0 %v427
    %613 = vmatpush1.msra.mxu0 %v426
    %614 = vmatprep.subr.mxu0 %v430
    %615 = vmatpush1.msra.mxu0 %v429
    %616 = vmatprep.subr.mxu0 %v433
    %617 = vmatpush1.msra.mxu0 %v432
    %618 = vmatprep.subr.mxu0 %v436
    %619 = vmatpush1.msra.mxu0 %v435
    %620 = vmatprep.subr.mxu0 %v439
    %621 = vmatpush1.msra.mxu0 %v438
    %622 = vmatprep.subr.mxu0 %v442
    %623 = vmatpush1.msra.mxu0 %v441
    %624 = vmatprep.subr.mxu0 %v445
    %625 = vmatpush1.msra.mxu0 %v444
    %626 = vmatprep.subr.mxu0 %v448
    %627 = vmatpush1.msra.mxu0 %v447
    %628 = vmatprep.subr.mxu0 %v451
    %629 = vmatpush1.msra.mxu0 %v450
    %630 = vmatprep.mubr.f32.mxu0 %v354
    %631 = vmatmul.mubr.f32.gmra.mrb[0].mxu0 %v353
    %v632 = vpop.f32.mrb[0].mxu0
    %v633 = vadd.f32 %v554, %v632
    %v634 = vpop.f32.mrb[0].mxu0
    %v635 = vadd.f32 %v558, %v634
    %636 = vdwg.mxu0
    %637 = vmatprep.subr.mxu0 %v454
    %638 = vmatpush1.msra.mxu0 %v453
    %639 = vmatprep.subr.mxu0 %v457
    %640 = vmatpush1.msra.mxu0 %v456
    %641 = vmatprep.subr.mxu0 %v460
    %642 = vmatpush1.msra.mxu0 %v459
    %643 = vmatprep.subr.mxu0 %v463
    %644 = vmatpush1.msra.mxu0 %v462
    %645 = vmatprep.subr.mxu0 %v466
    %646 = vmatpush1.msra.mxu0 %v465
    %647 = vmatprep.subr.mxu0 %v469
    %648 = vmatpush1.msra.mxu0 %v468
    %649 = vmatprep.subr.mxu0 %v472
    %650 = vmatpush1.msra.mxu0 %v471
    %651 = vmatprep.subr.mxu0 %v475
    %652 = vmatpush1.msra.mxu0 %v474
    %653 = vmatprep.subr.mxu0 %v478
    %654 = vmatpush1.msra.mxu0 %v477
    %655 = vmatprep.subr.mxu0 %v481
    %656 = vmatpush1.msra.mxu0 %v480
    %657 = vmatprep.subr.mxu0 %v484
    %658 = vmatpush1.msra.mxu0 %v483
    %659 = vmatprep.subr.mxu0 %v487
    %660 = vmatpush1.msra.mxu0 %v486
    %661 = vmatprep.subr.mxu0 %v490
    %662 = vmatpush1.msra.mxu0 %v489
    %663 = vmatprep.subr.mxu0 %v493
    %664 = vmatpush1.msra.mxu0 %v492
    %665 = vmatprep.subr.mxu0 %v496
    %666 = vmatpush1.msra.mxu0 %v495
    %667 = vmatprep.subr.mxu0 %v499
    %668 = vmatpush1.msra.mxu0 %v498
    %669 = vmatprep.subr.mxu0 %v502
    %670 = vmatpush1.msra.mxu0 %v501
    %671 = vmatprep.subr.mxu0 %v505
    %672 = vmatpush1.msra.mxu0 %v504
    %673 = vmatprep.subr.mxu0 %v508
    %674 = vmatpush1.msra.mxu0 %v507
    %675 = vmatprep.subr.mxu0 %v511
    %676 = vmatpush1.msra.mxu0 %v510
    %677 = vmatprep.subr.mxu0 %v514
    %678 = vmatpush1.msra.mxu0 %v513
    %679 = vmatprep.subr.mxu0 %v517
    %680 = vmatpush1.msra.mxu0 %v516
    %681 = vmatprep.subr.mxu0 %v520
    %682 = vmatpush1.msra.mxu0 %v519
    %683 = vmatprep.subr.mxu0 %v523
    %684 = vmatpush1.msra.mxu0 %v522
    %685 = vmatprep.subr.mxu0 %v526
    %686 = vmatpush1.msra.mxu0 %v525
    %687 = vmatprep.subr.mxu0 %v529
    %688 = vmatpush1.msra.mxu0 %v528
    %689 = vmatprep.subr.mxu0 %v532
    %690 = vmatpush1.msra.mxu0 %v531
    %691 = vmatprep.subr.mxu0 %v535
    %692 = vmatpush1.msra.mxu0 %v534
    %693 = vmatprep.subr.mxu0 %v538
    %694 = vmatpush1.msra.mxu0 %v537
    %695 = vmatprep.subr.mxu0 %v541
    %696 = vmatpush1.msra.mxu0 %v540
    %697 = vmatprep.subr.mxu0 %v544
    %698 = vmatpush1.msra.mxu0 %v543
    %699 = vmatprep.subr.mxu0 %v547
    %700 = vmatpush1.msra.mxu0 %v546
    %701 = vmatprep.mubr.f32.mxu0 %v356
    %702 = vmatmul.mubr.f32.gmra.mrb[0].mxu0 %v355
    %v703 = vpop.f32.mrb[0].mxu0
    %v704 = vadd.f32 %v633, %v703
    %v705 = vpop.f32.mrb[0].mxu0
    %v706 = vadd.f32 %v635, %v705
    %707 = vdwg.mxu0
    %708 = vmatprep.subr.mxu0 0.0
    %709 = vmatpush1.msra.mxu0 %v359
    %710 = vmatprep.subr.mxu0 0.0
    %711 = vmatpush1.msra.mxu0 %v362
    %712 = vmatprep.subr.mxu0 0.0
    %713 = vmatpush1.msra.mxu0 %v365
    %714 = vmatprep.subr.mxu0 0.0
    %715 = vmatpush1.msra.mxu0 %v368
    %716 = vmatprep.subr.mxu0 0.0
    %717 = vmatpush1.msra.mxu0 %v371
    %718 = vmatprep.subr.mxu0 0.0
    %719 = vmatpush1.msra.mxu0 %v374
    %720 = vmatprep.subr.mxu0 0.0
    %721 = vmatpush1.msra.mxu0 %v377
    %722 = vmatprep.subr.mxu0 0.0
    %723 = vmatpush1.msra.mxu0 %v380
    %724 = vmatprep.subr.mxu0 0.0
    %725 = vmatpush1.msra.mxu0 %v383
    %726 = vmatprep.subr.mxu0 0.0
    %727 = vmatpush1.msra.mxu0 %v386
    %728 = vmatprep.subr.mxu0 0.0
    %729 = vmatpush1.msra.mxu0 %v389
    %730 = vmatprep.subr.mxu0 0.0
    %731 = vmatpush1.msra.mxu0 %v392
    %732 = vmatprep.subr.mxu0 0.0
    %733 = vmatpush1.msra.mxu0 %v395
    %734 = vmatprep.subr.mxu0 0.0
    %735 = vmatpush1.msra.mxu0 %v398
    %736 = vmatprep.subr.mxu0 0.0
    %737 = vmatpush1.msra.mxu0 %v401
    %738 = vmatprep.subr.mxu0 0.0
    %739 = vmatpush1.msra.mxu0 %v404
    %740 = vmatprep.subr.mxu0 0.0
    %741 = vmatpush1.msra.mxu0 %v407
    %742 = vmatprep.subr.mxu0 0.0
    %743 = vmatpush1.msra.mxu0 %v410
    %744 = vmatprep.subr.mxu0 0.0
    %745 = vmatpush1.msra.mxu0 %v413
    %746 = vmatprep.subr.mxu0 0.0
    %747 = vmatpush1.msra.mxu0 %v416
    %748 = vmatprep.subr.mxu0 0.0
    %749 = vmatpush1.msra.mxu0 %v419
    %750 = vmatprep.subr.mxu0 0.0
    %751 = vmatpush1.msra.mxu0 %v422
    %752 = vmatprep.subr.mxu0 0.0
    %753 = vmatpush1.msra.mxu0 %v425
    %754 = vmatprep.subr.mxu0 0.0
    %755 = vmatpush1.msra.mxu0 %v428
    %756 = vmatprep.subr.mxu0 0.0
    %757 = vmatpush1.msra.mxu0 %v431
    %758 = vmatprep.subr.mxu0 0.0
    %759 = vmatpush1.msra.mxu0 %v434
    %760 = vmatprep.subr.mxu0 0.0
    %761 = vmatpush1.msra.mxu0 %v437
    %762 = vmatprep.subr.mxu0 0.0
    %763 = vmatpush1.msra.mxu0 %v440
    %764 = vmatprep.subr.mxu0 0.0
    %765 = vmatpush1.msra.mxu0 %v443
    %766 = vmatprep.subr.mxu0 0.0
    %767 = vmatpush1.msra.mxu0 %v446
    %768 = vmatprep.subr.mxu0 0.0
    %769 = vmatpush1.msra.mxu0 %v449
    %770 = vmatprep.subr.mxu0 0.0
    %771 = vmatpush1.msra.mxu0 %v452
    %772 = vmatprep.mubr.f32.mxu0 %v354
    %773 = vmatmul.mubr.f32.gmra.mrb[0].mxu0 %v353
    %v774 = vpop.f32.mrb[0].mxu0
    %v775 = vadd.f32 %v562, %v774
    %v776 = vpop.f32.mrb[0].mxu0
    %777 = vdwg.mxu0
    %778 = vmatprep.subr.mxu0 0.0
    %779 = vmatpush1.msra.mxu0 %v455
    %780 = vmatprep.subr.mxu0 0.0
    %781 = vmatpush1.msra.mxu0 %v458
    %782 = vmatprep.subr.mxu0 0.0
    %783 = vmatpush1.msra.mxu0 %v461
    %784 = vmatprep.subr.mxu0 0.0
    %785 = vmatpush1.msra.mxu0 %v464
    %786 = vmatprep.subr.mxu0 0.0
    %787 = vmatpush1.msra.mxu0 %v467
    %788 = vmatprep.subr.mxu0 0.0
    %789 = vmatpush1.msra.mxu0 %v470
    %790 = vmatprep.subr.mxu0 0.0
    %791 = vmatpush1.msra.mxu0 %v473
    %792 = vmatprep.subr.mxu0 0.0
    %793 = vmatpush1.msra.mxu0 %v476
    %794 = vmatprep.subr.mxu0 0.0
    %795 = vmatpush1.msra.mxu0 %v479
    %796 = vmatprep.subr.mxu0 0.0
    %797 = vmatpush1.msra.mxu0 %v482
    %798 = vmatprep.subr.mxu0 0.0
    %799 = vmatpush1.msra.mxu0 %v485
    %800 = vmatprep.subr.mxu0 0.0
    %801 = vmatpush1.msra.mxu0 %v488
    %802 = vmatprep.subr.mxu0 0.0
    %803 = vmatpush1.msra.mxu0 %v491
    %804 = vmatprep.subr.mxu0 0.0
    %805 = vmatpush1.msra.mxu0 %v494
    %806 = vmatprep.subr.mxu0 0.0
    %807 = vmatpush1.msra.mxu0 %v497
    %808 = vmatprep.subr.mxu0 0.0
    %809 = vmatpush1.msra.mxu0 %v500
    %810 = vmatprep.subr.mxu0 0.0
    %811 = vmatpush1.msra.mxu0 %v503
    %812 = vmatprep.subr.mxu0 0.0
    %813 = vmatpush1.msra.mxu0 %v506
    %814 = vmatprep.subr.mxu0 0.0
    %815 = vmatpush1.msra.mxu0 %v509
    %816 = vmatprep.subr.mxu0 0.0
    %817 = vmatpush1.msra.mxu0 %v512
    %818 = vmatprep.subr.mxu0 0.0
    %819 = vmatpush1.msra.mxu0 %v515
    %820 = vmatprep.subr.mxu0 0.0
    %821 = vmatpush1.msra.mxu0 %v518
    %822 = vmatprep.subr.mxu0 0.0
    %823 = vmatpush1.msra.mxu0 %v521
    %824 = vmatprep.subr.mxu0 0.0
    %825 = vmatpush1.msra.mxu0 %v524
    %826 = vmatprep.subr.mxu0 0.0
    %827 = vmatpush1.msra.mxu0 %v527
    %828 = vmatprep.subr.mxu0 0.0
    %829 = vmatpush1.msra.mxu0 %v530
    %830 = vmatprep.subr.mxu0 0.0
    %831 = vmatpush1.msra.mxu0 %v533
    %832 = vmatprep.subr.mxu0 0.0
    %833 = vmatpush1.msra.mxu0 %v536
    %834 = vmatprep.subr.mxu0 0.0
    %835 = vmatpush1.msra.mxu0 %v539
    %836 = vmatprep.subr.mxu0 0.0
    %837 = vmatpush1.msra.mxu0 %v542
    %838 = vmatprep.subr.mxu0 0.0
    %839 = vmatpush1.msra.mxu0 %v545
    %840 = vmatprep.subr.mxu0 0.0
    %841 = vmatpush1.msra.mxu0 %v548
    %842 = vmatprep.mubr.f32.mxu0 %v356
    %843 = vmatmul.mubr.f32.gmra.mrb[0].mxu0 %v355
    %v844 = vpop.f32.mrb[0].mxu0
    %v845 = vadd.f32 %v775, %v844
    %v846 = vpop.f32.mrb[0].mxu0
    %847 = vdwg.mxu0
    %v848 = vld [vmem:[%s7] sm:$0x7]
    %v849 = vld [vmem:[%s8] sm:$0x7]
    %v850 = vsel %vm265, %v704, 0.0
    %v851 = vsel %vm265, %v706, 0.0
    %v852 = vadd.f32 %v850, %v851
    %v853 = vsel %vm265, %v845, 0.0
    %v854 = vadd.f32 %v852, %v853
    %855 = vadd.xlane.f32.xlu0 %v854
    %v856 = vpop.xlane.xlu0 %855
    %v857 = vmul.f32 %v856, 0.0033333334
    %v858 = vmul.f32 %v704, %v704
    %v859 = vmul.f32 %v706, %v706
    %v860 = vmul.f32 %v845, %v845
    %v861 = vsel %vm265, %v858, 0.0
    %v862 = vsel %vm265, %v859, 0.0
    %v863 = vadd.f32 %v861, %v862
    %v864 = vsel %vm265, %v860, 0.0
    %v865 = vadd.f32 %v863, %v864
    %866 = vadd.xlane.f32.xlu0 %v865
    %v867 = vpop.xlane.xlu0 %866
    %v868 = vmul.f32 %v867, 0.0033333334
    %v869 = vmul.f32 %v857, %v857
    %v870 = vsub.f32 %v868, %v869
    %v871 = vmax.f32 %v870, 0.0
    %v872 = vsub.f32 %v704, %v857
    %v873 = vsub.f32 %v706, %v857
    %v874 = vsub.f32 %v845, %v857
    %v875 = vadd.f32 %v871, 1e-05
    %v876 = vrsqrt.pop %v875
    %v877 = vmul.f32 %v872, %v876
    %v878 = vmul.f32 %v873, %v876
    %v879 = vmul.f32 %v874, %v876
    %v881 = vlaneseq
    %v882 = vshrl.u32 %v881, 7
    %v883 = vsub.s32 0, %v882
    %v884 = vrot.slane %v848, %v883
    %v885 = vlaneseq
    %v886 = vshrl.u32 %v885, 7
    %v887 = vsub.s32 1, %v886
    %v888 = vrot.slane %v848, %v887
    %v889 = vlaneseq
    %v890 = vshrl.u32 %v889, 7
    %v891 = vsub.s32 2, %v890
    %v892 = vrot.slane %v848, %v891
    %v896 = vmul.f32 %v877, %v884
    %v897 = vmul.f32 %v878, %v888
    %v898 = vmul.f32 %v879, %v892
    %v900 = vlaneseq
    %v901 = vshrl.u32 %v900, 7
    %v902 = vsub.s32 0, %v901
    %v903 = vrot.slane %v849, %v902
    %v904 = vlaneseq
    %v905 = vshrl.u32 %v904, 7
    %v906 = vsub.s32 1, %v905
    %v907 = vrot.slane %v849, %v906
    %v908 = vlaneseq
    %v909 = vshrl.u32 %v908, 7
    %v910 = vsub.s32 2, %v909
    %v911 = vrot.slane %v849, %v910
    %v915 = vadd.f32 %v896, %v903
    %v916 = vadd.f32 %v897, %v907
    %v917 = vadd.f32 %v898, %v911
    %v918 = vmax.f32 %v915, 0.0
    %v919 = vmax.f32 %v916, 0.0
    %v920 = vmax.f32 %v917, 0.0
    %v921 = vld [vmem:[#allocation8] sm:$0xff]
    %v922 = vld [vmem:[#allocation8 + $0x8] sm:$0xff]
    %v923 = vld [vmem:[#allocation8 + $0x10] sm:$0xff]
    %v924 = vld [vmem:[#allocation8 + $0x18] sm:$0xff]
    %v925 = vld [vmem:[#allocation8 + $0x20] sm:$0xff]
    %v926 = vld [vmem:[#allocation8 + $0x28] sm:$0xff]
    %v927 = vld [vmem:[#allocation8 + $0x30] sm:$0xff]
    %v928 = vld [vmem:[#allocation8 + $0x38] sm:$0xff]
    %v929 = vld [vmem:[#allocation8 + $0x40] sm:$0xff]
    %v930 = vld [vmem:[#allocation8 + $0x48] sm:$0xff]
    %v931 = vld [vmem:[#allocation8 + $0x50] sm:$0xff]
    %v932 = vld [vmem:[#allocation8 + $0x58] sm:$0xff]
    %v933 = vld [vmem:[#allocation8 + $0x60] sm:$0xff]
    %v934 = vld [vmem:[#allocation8 + $0x68] sm:$0xff]
    %v935 = vld [vmem:[#allocation8 + $0x70] sm:$0xff]
    %v936 = vld [vmem:[#allocation8 + $0x78] sm:$0xff]
    %v937 = vld [vmem:[#allocation8 + $0x80] sm:$0xff]
    %v938 = vld [vmem:[#allocation8 + $0x88] sm:$0xff]
    %v939 = vld [vmem:[#allocation8 + $0x90] sm:$0xff]
    %v940 = vld [vmem:[#allocation8 + $0x98] sm:$0xff]
    %v941 = vld [vmem:[#allocation8 + $0xa0] sm:$0xff]
    %v942 = vld [vmem:[#allocation8 + $0xa8] sm:$0xff]
    %v943 = vld [vmem:[#allocation8 + $0xb0] sm:$0xff]
    %v944 = vld [vmem:[#allocation8 + $0xb8] sm:$0xff]
    %v945 = vld [vmem:[#allocation8 + $0xc0] sm:$0xff]
    %v946 = vld [vmem:[#allocation8 + $0xc8] sm:$0xff]
    %v947 = vld [vmem:[#allocation8 + $0xd0] sm:$0xff]
    %v948 = vld [vmem:[#allocation8 + $0xd8] sm:$0xff]
    %v949 = vld [vmem:[#allocation8 + $0xe0] sm:$0xff]
    %v950 = vld [vmem:[#allocation8 + $0xe8] sm:$0xff]
    %v951 = vld [vmem:[#allocation8 + $0xf0] sm:$0xff]
    %v952 = vld [vmem:[#allocation8 + $0xf8] sm:$0xff]
    %v953 = vld [vmem:[#allocation8 + $0x100] sm:$0xff]
    %v954 = vld [vmem:[#allocation8 + $0x108] sm:$0xff]
    %v955 = vld [vmem:[#allocation8 + $0x110] sm:$0xff]
    %v956 = vld [vmem:[#allocation8 + $0x118] sm:$0xff]
    %v957 = vld [vmem:[#allocation8 + $0x120] sm:$0xff]
    %v958 = vld [vmem:[#allocation8 + $0x128] sm:$0xff]
    %v959 = vld [vmem:[#allocation8 + $0x130] sm:$0xff]
    %v960 = vld [vmem:[#allocation8 + $0x138] sm:$0xff]
    %v961 = vld [vmem:[#allocation8 + $0x140] sm:$0xff]
    %v962 = vld [vmem:[#allocation8 + $0x148] sm:$0xff]
    %v963 = vld [vmem:[#allocation8 + $0x150] sm:$0xff]
    %v964 = vld [vmem:[#allocation8 + $0x158] sm:$0xff]
    %v965 = vld [vmem:[#allocation8 + $0x160] sm:$0xff]
    %v966 = vld [vmem:[#allocation8 + $0x168] sm:$0xff]
    %v967 = vld [vmem:[#allocation8 + $0x170] sm:$0xff]
    %v968 = vld [vmem:[#allocation8 + $0x178] sm:$0xff]
    %v969 = vld [vmem:[%s10] sm:$0x1]
    %v971 = vlaneseq
    %v972 = vshrl.u32 %v971, 7
    %v973 = vsub.s32 0, %v972
    %v974 = vrot.slane %v969, %v973
    %976 = vmatprep.subr.mxu0 0.0
    %977 = vmatpush1.msra.mxu0 %v921
    %978 = vmatprep.subr.mxu0 0.0
    %979 = vmatpush1.msra.mxu0 %v922
    %980 = vmatprep.subr.mxu0 0.0
    %981 = vmatpush1.msra.mxu0 %v923
    %982 = vmatprep.subr.mxu0 0.0
    %983 = vmatpush1.msra.mxu0 %v924
    %984 = vmatprep.subr.mxu0 0.0
    %985 = vmatpush1.msra.mxu0 %v925
    %986 = vmatprep.subr.mxu0 0.0
    %987 = vmatpush1.msra.mxu0 %v926
    %988 = vmatprep.subr.mxu0 0.0
    %989 = vmatpush1.msra.mxu0 %v927
    %990 = vmatprep.subr.mxu0 0.0
    %991 = vmatpush1.msra.mxu0 %v928
    %992 = vmatprep.subr.mxu0 0.0
    %993 = vmatpush1.msra.mxu0 %v929
    %994 = vmatprep.subr.mxu0 0.0
    %995 = vmatpush1.msra.mxu0 %v930
    %996 = vmatprep.subr.mxu0 0.0
    %997 = vmatpush1.msra.mxu0 %v931
    %998 = vmatprep.subr.mxu0 0.0
    %999 = vmatpush1.msra.mxu0 %v932
    %1000 = vmatprep.subr.mxu0 0.0
    %1001 = vmatpush1.msra.mxu0 %v933
    %1002 = vmatprep.subr.mxu0 0.0
    %1003 = vmatpush1.msra.mxu0 %v934
    %1004 = vmatprep.subr.mxu0 0.0
    %1005 = vmatpush1.msra.mxu0 %v935
    %1006 = vmatprep.subr.mxu0 0.0
    %1007 = vmatpush1.msra.mxu0 %v936
    %1008 = vmatprep.subr.mxu0 0.0
    %1009 = vmatpush1.msra.mxu0 %v937
    %1010 = vmatprep.subr.mxu0 0.0
    %1011 = vmatpush1.msra.mxu0 %v938
    %1012 = vmatprep.subr.mxu0 0.0
    %1013 = vmatpush1.msra.mxu0 %v939
    %1014 = vmatprep.subr.mxu0 0.0
    %1015 = vmatpush1.msra.mxu0 %v940
    %1016 = vmatprep.subr.mxu0 0.0
    %1017 = vmatpush1.msra.mxu0 %v941
    %1018 = vmatprep.subr.mxu0 0.0
    %1019 = vmatpush1.msra.mxu0 %v942
    %1020 = vmatprep.subr.mxu0 0.0
    %1021 = vmatpush1.msra.mxu0 %v943
    %1022 = vmatprep.subr.mxu0 0.0
    %1023 = vmatpush1.msra.mxu0 %v944
    %1024 = vmatprep.subr.mxu0 0.0
    %1025 = vmatpush1.msra.mxu0 %v945
    %1026 = vmatprep.subr.mxu0 0.0
    %1027 = vmatpush1.msra.mxu0 %v946
    %1028 = vmatprep.subr.mxu0 0.0
    %1029 = vmatpush1.msra.mxu0 %v947
    %1030 = vmatprep.subr.mxu0 0.0
    %1031 = vmatpush1.msra.mxu0 %v948
    %1032 = vmatprep.subr.mxu0 0.0
    %1033 = vmatpush1.msra.mxu0 %v949
    %1034 = vmatprep.subr.mxu0 0.0
    %1035 = vmatpush1.msra.mxu0 %v950
    %1036 = vmatprep.subr.mxu0 0.0
    %1037 = vmatpush1.msra.mxu0 %v951
    %1038 = vmatprep.subr.mxu0 0.0
    %1039 = vmatpush1.msra.mxu0 %v952
    %1040 = vmatprep.mubr.f32.mxu0 %v919
    %1041 = vmatmul.mubr.f32.gmra.mrb[0].mxu0 %v918
    %v1042 = vpop.f32.mrb[0].mxu0
    %v1043 = vadd.f32 %v974, %v1042
    %v1044 = vpop.f32.mrb[0].mxu0
    %1045 = vdwg.mxu0
    %1046 = vmatprep.subr.mxu0 0.0
    %1047 = vmatpush1.msra.mxu0 %v953
    %1048 = vmatprep.subr.mxu0 0.0
    %1049 = vmatpush1.msra.mxu0 %v954
    %1050 = vmatprep.subr.mxu0 0.0
    %1051 = vmatpush1.msra.mxu0 %v955
    %1052 = vmatprep.subr.mxu0 0.0
    %1053 = vmatpush1.msra.mxu0 %v956
    %1054 = vmatprep.subr.mxu0 0.0
    %1055 = vmatpush1.msra.mxu0 %v957
    %1056 = vmatprep.subr.mxu0 0.0
    %1057 = vmatpush1.msra.mxu0 %v958
    %1058 = vmatprep.subr.mxu0 0.0
    %1059 = vmatpush1.msra.mxu0 %v959
    %1060 = vmatprep.subr.mxu0 0.0
    %1061 = vmatpush1.msra.mxu0 %v960
    %1062 = vmatprep.subr.mxu0 0.0
    %1063 = vmatpush1.msra.mxu0 %v961
    %1064 = vmatprep.subr.mxu0 0.0
    %1065 = vmatpush1.msra.mxu0 %v962
    %1066 = vmatprep.subr.mxu0 0.0
    %1067 = vmatpush1.msra.mxu0 %v963
    %1068 = vmatprep.subr.mxu0 0.0
    %1069 = vmatpush1.msra.mxu0 %v964
    %1070 = vmatprep.subr.mxu0 0.0
    %1071 = vmatpush1.msra.mxu0 %v965
    %1072 = vmatprep.subr.mxu0 0.0
    %1073 = vmatpush1.msra.mxu0 %v966
    %1074 = vmatprep.subr.mxu0 0.0
    %1075 = vmatpush1.msra.mxu0 %v967
    %1076 = vmatprep.subr.mxu0 0.0
    %1077 = vmatpush1.msra.mxu0 %v968
    %1078 = vmatprep.subr.mxu0 0.0
    %1079 = vmatpush1.msra.mxu0 0.0
    %1080 = vmatprep.subr.mxu0 0.0
    %1081 = vmatpush1.msra.mxu0 0.0
    %1082 = vmatprep.subr.mxu0 0.0
    %1083 = vmatpush1.msra.mxu0 0.0
    %1084 = vmatprep.subr.mxu0 0.0
    %1085 = vmatpush1.msra.mxu0 0.0
    %1086 = vmatprep.subr.mxu0 0.0
    %1087 = vmatpush1.msra.mxu0 0.0
    %1088 = vmatprep.subr.mxu0 0.0
    %1089 = vmatpush1.msra.mxu0 0.0
    %1090 = vmatprep.subr.mxu0 0.0
    %1091 = vmatpush1.msra.mxu0 0.0
    %1092 = vmatprep.subr.mxu0 0.0
    %1093 = vmatpush1.msra.mxu0 0.0
    %1094 = vmatprep.subr.mxu0 0.0
    %1095 = vmatpush1.msra.mxu0 0.0
    %1096 = vmatprep.subr.mxu0 0.0
    %1097 = vmatpush1.msra.mxu0 0.0
    %1098 = vmatprep.subr.mxu0 0.0
    %1099 = vmatpush1.msra.mxu0 0.0
    %1100 = vmatprep.subr.mxu0 0.0
    %1101 = vmatpush1.msra.mxu0 0.0
    %1102 = vmatprep.subr.mxu0 0.0
    %1103 = vmatpush1.msra.mxu0 0.0
    %1104 = vmatprep.subr.mxu0 0.0
    %1105 = vmatpush1.msra.mxu0 0.0
    %1106 = vmatprep.subr.mxu0 0.0
    %1107 = vmatpush1.msra.mxu0 0.0
    %1108 = vmatprep.subr.mxu0 0.0
    %1109 = vmatpush1.msra.mxu0 0.0
    %1110 = vmatprep.mubr.f32.mxu0 0.0
    %1111 = vmatmul.mubr.f32.gmra.mrb[0].mxu0 %v920
    %v1112 = vpop.f32.mrb[0].mxu0
    %v1113 = vadd.f32 %v1043, %v1112
    %v1114 = vpop.f32.mrb[0].mxu0
    %1115 = vdwg.mxu0
    %v1116 = vtanh.pop %v1113
    %1117 = vst [vmem:[#allocation10] sm:$0x3] %v1116
    // Predicated region
    $region62: #{tpu_custom_call.1} parent=1 // pred_check
      _
    $region63: #{tpu_custom_call.1} parent=1 // pred_check_branch
      %1119 = sbr.rel (0) target = $region65
    $region64: #{tpu_custom_call.1} parent=1 // pred_region
      %s1121 = ssub.s32 32, 32
      %1122 = vsyncadd [#allocation4], %s1121
      %s1124 = sshll.u32 [#allocation10], 4
      %s1125 = int_to_ptr.vmem [resolvable:$true] %s1124
      %1127 = dma.vmem_to_hbm [thread:$0]  %s1125, 32, %s11, [#allocation4]
    $region65: #{tpu_custom_call.1} parent=1 // pred_fallthru
      _
    // Predicated region
    $region66: #{tpu_custom_call.1} parent=1 // pred_check
      _
    $region67: #{tpu_custom_call.1} parent=1 // pred_check_branch
      %1129 = sbr.rel (0) target = $region69
    $region68: #{tpu_custom_call.1} parent=1 // pred_region
      %1130 = dma.done [#allocation4], 32
    $region69: #{tpu_custom_call.1} parent=1 // pred_fallthru
      _
    %1131 = vsyncpa [#allocation3], 1
    %1132 = vsyncpa [#allocation6], 1
    %1133 = vsyncpa [#allocation9], 1
    %1134 = vsyncpa [#allocation4], 1

</llo_original>
